<compile_context>
chip_gen: v6e
topology: v6e:2x2x1
jax: 0.10.0
libtpu: 0.0.40
codegen_flags: <defaults>
</compile_context>

<pallas_src>
import jax
import jax.numpy as jnp
from jax.experimental import pallas as pl
from jax.experimental.pallas import tpu as pltpu


def _make_fused_kernel(cin):
    """Fused (1x1 conv + bias + concat/slice replication) over flattened planes."""

    def kernel(xp_ref, w_ref, b_ref, o_ref):
        # xp_ref: (Cin, P)       f32 VMEM  zero-padded input planes, P = (H+2)*(W+2)
        # w_ref : (C_total, Cin) f32 VMEM  per-OUTPUT-channel weights (concat/slice folded)
        # b_ref : (C_total, 1)   f32 VMEM  per-OUTPUT-channel bias
        # o_ref : (C_total, P)   f32 VMEM  final model output for one batch element
        acc = w_ref[:, 0:1] * xp_ref[0:1, :]          # (C_total,1)*(1,P) -> (C_total,P)
        for k in range(1, cin):                       # 3 unrolled VPU FMAs total
            acc = acc + w_ref[:, k:k + 1] * xp_ref[k:k + 1, :]
        acc = acc + b_ref[...]                        # lane-broadcast bias
        o_ref[...] = acc.astype(o_ref.dtype)          # one dense (C_total, P) store

    return kernel


def model_forward(x_nchw, w_oihw, bias):
    """Exact forward semantics of the PyTorch Model. x_nchw: (N, 3, H, W) float32."""
    N, Cin, H, W = x_nchw.shape
    Cout = w_oihw.shape[0]
    Hp, Wp = H + 2, W + 2
    P = Hp * Wp

    # torch channel-slice semantics: tl1 = ts[:, 0:int(0.5 * (W+2))], clamped to 2*Cout.
    n_rep = min(2 * Cout, int(0.5 * Wp))
    C_total = 2 * Cout + n_rep

    # Final-output-channel -> conv-channel map; fold both concats + the slice into a
    # tiny weight/bias gather done once, outside the kernel.
    chan_map = jnp.asarray(
        [c % Cout for c in range(2 * Cout)] + [c % Cout for c in range(n_rep)],
        dtype=jnp.int32,
    )
    w_full = w_oihw.reshape(Cout, Cin).astype(jnp.float32)[chan_map]      # (C_total, Cin)
    b_full = bias.astype(jnp.float32)[chan_map].reshape(C_total, 1)       # (C_total, 1)

    # Zero-pad the 3-channel input once (border conv output == bias falls out of the
    # same FMAs), then flatten the spatial dims -> lane-dense last axis.
    xp = jnp.pad(x_nchw.astype(jnp.float32), ((0, 0), (0, 0), (1, 1), (1, 1)))
    xp_flat = xp.reshape(N, Cin, P)

    # VMEM guard: double-buffered input + output blocks plus headroom, capped below
    # v7x's 64 MiB physical VMEM.
    block_bytes = 4 * P * (Cin + C_total)
    vmem_limit = int(min(max(4 * block_bytes + (2 << 20), 16 << 20), 56 << 20))

    kernel = _make_fused_kernel(Cin)

    out_flat = pl.pallas_call(
        kernel,
        out_shape=jax.ShapeDtypeStruct((N, C_total, P), jnp.float32),
        grid=(N,),
        in_specs=[
            pl.BlockSpec((None, Cin, P), lambda n: (n, 0, 0)),     # padded input planes
            pl.BlockSpec((C_total, Cin), lambda n: (0, 0)),        # gathered weights
            pl.BlockSpec((C_total, 1), lambda n: (0, 0)),          # gathered bias
        ],
        out_specs=pl.BlockSpec((None, C_total, P), lambda n: (n, 0, 0)),
        compiler_params=pltpu.CompilerParams(
            dimension_semantics=("parallel",),
            vmem_limit_bytes=vmem_limit,
        ),
    )(xp_flat, w_full, b_full)

    # Free, row-major-contiguous reshape back to NCHW.
    return out_flat.reshape(N, C_total, Hp, Wp)


if __name__ == "__main__":
    key = jax.random.PRNGKey(0)
    kx, kw, kb = jax.random.split(key, 3)

    # Small shapes consistent with the module: batch=2, in_ch=3, spatial=16.
    N, Cin, H, W = 2, 3, 16, 16
    Cout = 8

    x = jax.random.normal(kx, (N, Cin, H, W), dtype=jnp.float32)
    w = jax.random.normal(kw, (Cout, Cin, 1, 1), dtype=jnp.float32) * 0.1  # Conv2d (O,I,1,1)
    b = jax.random.normal(kb, (Cout,), dtype=jnp.float32) * 0.1

    out = jax.jit(model_forward)(x, w, b)
    out = jax.block_until_ready(out)

    # Reference: lax conv (highest precision, matches the kernel's exact f32 FMAs)
    # plus the same concat / slice glue.
    ref_conv = jax.lax.conv_general_dilated(
        x, w, window_strides=(1, 1), padding=((1, 1), (1, 1)),
        dimension_numbers=("NCHW", "OIHW", "NCHW"),
        precision=jax.lax.Precision.HIGHEST,
    ) + b.reshape(1, Cout, 1, 1)
    ref_ts = jnp.concatenate([ref_conv, ref_conv], axis=1)
    ref_tl1 = ref_ts[:, 0:int(0.5 * ref_ts.shape[-1])]
    ref = jnp.concatenate([ref_ts, ref_tl1], axis=1)

    assert out.shape == ref.shape, (out.shape, ref.shape)
    assert jnp.allclose(out, ref, atol=1e-5, rtol=1e-5)

    print("KERNEL_OK")
</pallas_src>

<mosaic_0001>
module attributes {stable_mosaic.version = 11 : i64} {
  func.func @kernel(%arg0: i32, %arg1: memref<1x3x324xf32, #tpu.memory_space<vmem>>, %arg2: memref<25x3xf32, #tpu.memory_space<vmem>>, %arg3: memref<25x1xf32, #tpu.memory_space<vmem>>, %arg4: memref<1x25x324xf32, #tpu.memory_space<vmem>>) attributes {dimension_semantics = [#tpu.dimension_semantics<parallel>], iteration_bounds = array<i64: 2>, scalar_prefetch = 0 : i64, scratch_operands = 0 : i64, tpu.core_type = #tpu.core_type<tc>, window_params = [{transform_indices = @transform_0, window_bounds = array<i64: 1, 3, 324>}, {pipeline_mode = #tpu.pipeline_mode<synchronous>, transform_indices = @transform_1, window_bounds = array<i64: 25, 3>}, {pipeline_mode = #tpu.pipeline_mode<synchronous>, transform_indices = @transform_2, window_bounds = array<i64: 25, 1>}, {transform_indices = @transform_3, window_bounds = array<i64: 1, 25, 324>}]} {
    %c0 = arith.constant 0 : index
    %c0_0 = arith.constant 0 : index
    %0 = vector.load %arg2[%c0, %c0_0] : memref<25x3xf32, #tpu.memory_space<vmem>>, vector<25x1xf32>
    %c0_1 = arith.constant 0 : index
    %c0_2 = arith.constant 0 : index
    %c0_3 = arith.constant 0 : index
    %1 = vector.load %arg1[%c0_1, %c0_2, %c0_3] : memref<1x3x324xf32, #tpu.memory_space<vmem>>, vector<1x1x324xf32>
    %2 = vector.shape_cast %1 : vector<1x1x324xf32> to vector<1x324xf32>
    %3 = vector.broadcast %0 : vector<25x1xf32> to vector<25x324xf32>
    %4 = vector.broadcast %2 : vector<1x324xf32> to vector<25x324xf32>
    %5 = arith.mulf %3, %4 : vector<25x324xf32>
    %c0_4 = arith.constant 0 : index
    %c1 = arith.constant 1 : index
    %6 = vector.load %arg2[%c0_4, %c1] : memref<25x3xf32, #tpu.memory_space<vmem>>, vector<25x1xf32>
    %c0_5 = arith.constant 0 : index
    %c1_6 = arith.constant 1 : index
    %c0_7 = arith.constant 0 : index
    %7 = vector.load %arg1[%c0_5, %c1_6, %c0_7] : memref<1x3x324xf32, #tpu.memory_space<vmem>>, vector<1x1x324xf32>
    %8 = vector.shape_cast %7 : vector<1x1x324xf32> to vector<1x324xf32>
    %9 = vector.broadcast %6 : vector<25x1xf32> to vector<25x324xf32>
    %10 = vector.broadcast %8 : vector<1x324xf32> to vector<25x324xf32>
    %11 = arith.mulf %9, %10 : vector<25x324xf32>
    %12 = arith.addf %5, %11 : vector<25x324xf32>
    %c0_8 = arith.constant 0 : index
    %c2 = arith.constant 2 : index
    %13 = vector.load %arg2[%c0_8, %c2] : memref<25x3xf32, #tpu.memory_space<vmem>>, vector<25x1xf32>
    %c0_9 = arith.constant 0 : index
    %c2_10 = arith.constant 2 : index
    %c0_11 = arith.constant 0 : index
    %14 = vector.load %arg1[%c0_9, %c2_10, %c0_11] : memref<1x3x324xf32, #tpu.memory_space<vmem>>, vector<1x1x324xf32>
    %15 = vector.shape_cast %14 : vector<1x1x324xf32> to vector<1x324xf32>
    %16 = vector.broadcast %13 : vector<25x1xf32> to vector<25x324xf32>
    %17 = vector.broadcast %15 : vector<1x324xf32> to vector<25x324xf32>
    %18 = arith.mulf %16, %17 : vector<25x324xf32>
    %19 = arith.addf %12, %18 : vector<25x324xf32>
    %c0_12 = arith.constant 0 : index
    %c0_13 = arith.constant 0 : index
    %20 = vector.load %arg3[%c0_12, %c0_13] : memref<25x1xf32, #tpu.memory_space<vmem>>, vector<25x1xf32>
    %21 = vector.broadcast %20 : vector<25x1xf32> to vector<25x324xf32>
    %22 = arith.addf %19, %21 : vector<25x324xf32>
    %c0_14 = arith.constant 0 : index
    %c0_15 = arith.constant 0 : index
    %c0_16 = arith.constant 0 : index
    %23 = vector.load %arg4[%c0_14, %c0_15, %c0_16] : memref<1x25x324xf32, #tpu.memory_space<vmem>>, vector<1x25x324xf32>
    %24 = vector.shape_cast %23 : vector<1x25x324xf32> to vector<25x324xf32>
    %25 = vector.shape_cast %22 : vector<25x324xf32> to vector<1x25x324xf32>
    tpu.vector_store %arg4[%c0_14, %c0_15, %c0_16], %25 {strides = array<i32>} : memref<1x25x324xf32, #tpu.memory_space<vmem>>, vector<1x25x324xf32>,
    return
  }
  func.func @transform_0(%arg0: i32) -> (i32, i32, i32) {
    %c0_i32 = arith.constant 0 : i32
    %c0_i32_0 = arith.constant 0 : i32
    %c0_i32_1 = arith.constant 0 : i32
    return %arg0, %c0_i32, %c0_i32_0 : i32, i32, i32
  }
  func.func @transform_1(%arg0: i32) -> (i32, i32) {
    %c0_i32 = arith.constant 0 : i32
    %c0_i32_0 = arith.constant 0 : i32
    %c0_i32_1 = arith.constant 0 : i32
    return %c0_i32, %c0_i32_0 : i32, i32
  }
  func.func @transform_2(%arg0: i32) -> (i32, i32) {
    %c0_i32 = arith.constant 0 : i32
    %c0_i32_0 = arith.constant 0 : i32
    %c0_i32_1 = arith.constant 0 : i32
    return %c0_i32, %c0_i32_0 : i32, i32
  }
  func.func @transform_3(%arg0: i32) -> (i32, i32, i32) {
    %c0_i32 = arith.constant 0 : i32
    %c0_i32_0 = arith.constant 0 : i32
    %c0_i32_1 = arith.constant 0 : i32
    return %arg0, %c0_i32, %c0_i32_0 : i32, i32, i32
  }
}

</mosaic_0001>

<llo_original>
// kernel: model_forward.1
$region0: #{model_forward.1}
  #allocation0 [shape = 'u32[]', space=smem, size = 0x4, offset = 0x4, fixed_abs, tag = 'smem constant byte address 0x4 - core index']
  #allocation1 [shape = 'u32[144,128]{1,0:T(1,128)}', space=vmem, size = 0x12000, scoped, tag = 'internal scratch']
  %s0 = inlined_call_operand.vmem [shape: f32[2,3,324], index: 0, kind: input, shape index: {}]
  %s1 = inlined_call_operand.vmem [shape: f32[25,3], index: 1, kind: input, shape index: {}]
  %s2 = inlined_call_operand.vmem [shape: f32[25,1], index: 2, kind: input, shape index: {}]
  %s3 = inlined_call_operand.vmem [shape: f32[2,25,324], index: 3, kind: output, shape index: {}]
  %s4 = sld [smem:[#allocation0]]
  $region45: #{model_forward.1} parent=0
    _
  %s6 = ssub.s32 1, %s4
  %s7 = scalar_select 0, %s6, %s4
  loop: start=0, step=1, limit=4
  $region2: #{model_forward.1} parent=0 // loop_pre_header
    _
  $region3: #{model_forward.1} parent=0 // loop_header
    %s9 = sphi 0, %s13
    %p10 = scmp.ge.s32.totalorder %s9, 4
    %s19 = sphi 0, %s21
    %s22 = sphi 0, %s19
    %s23 = sphi 0, %s22
    %s39 = sphi 0, %s23
    %s43 = sphi 0, %s43
    %s45 = sphi 0, %s43
    %s46 = sphi 0, %s45
    %s60 = sphi 0, %s46
    %s64 = sphi 0, %s64
    %s66 = sphi 0, %s64
    %s67 = sphi 0, %s66
    %s81 = sphi 0, %s67
    %s87 = sphi 0, %s89
    %s90 = sphi 0, %s87
    %s91 = sphi 0, %s90
    %s107 = sphi 0, %s91
  $region4: #{model_forward.1} parent=0 // loop_header_branch
    %12 = sbr.rel (%p10) target = $region8
  $region5: #{model_forward.1} parent=0 // loop_body
    %s14 = ssub.s32 %s9, 1
    %s15 = ssub.s32 %s9, 2
    %s16 = sadd.s32 %s9, 1
    %s17 = ssub.s32 %s9, %s16
    %p18 = scmp.eq.s32.totalorder %s17, 0
    %s20 = sadd.s32 %s19, 1
    %s21 = scalar_select %p18, %s19, %s20
    %p24 = pneg %p18
    %p25 = scmp.eq.s32.totalorder %s9, 1
    %p26 = por %p24, %p25
    %p27 = scmp.ne.s32.totalorder %s19, %s22
    %p28 = scmp.eq.s32.totalorder %s9, 0
    %p29 = por %p27, %p28
    %p30 = scmp.ne.s32.totalorder %s19, %s22
    %p31 = scmp.eq.s32.totalorder %s14, 1
    %p32 = por %p30, %p31
    %p33 = scmp.ne.s32.totalorder %s22, %s23
    %p34 = scmp.eq.s32.totalorder %s14, 0
    %p35 = por %p33, %p34
    %p36 = scmp.ne.s32.totalorder %s22, %s23
    %p37 = scmp.eq.s32.totalorder %s15, 1
    %p38 = por %p36, %p37
    %p40 = scmp.ne.s32.totalorder %s23, %s39
    %p41 = scmp.eq.s32.totalorder %s15, 0
    %p42 = por %p40, %p41
    %s44 = sadd.s32 %s43, 1
    %p47 = scmp.eq.s32.totalorder %s9, 1
    %p48 = scmp.ne.s32.totalorder %s43, %s45
    %p49 = scmp.eq.s32.totalorder %s9, 0
    %p50 = por %p48, %p49
    %p51 = scmp.ne.s32.totalorder %s43, %s45
    %p52 = scmp.eq.s32.totalorder %s14, 1
    %p53 = por %p51, %p52
    %p54 = scmp.ne.s32.totalorder %s45, %s46
    %p55 = scmp.eq.s32.totalorder %s14, 0
    %p56 = por %p54, %p55
    %p57 = scmp.ne.s32.totalorder %s45, %s46
    %p58 = scmp.eq.s32.totalorder %s15, 1
    %p59 = por %p57, %p58
    %p61 = scmp.ne.s32.totalorder %s46, %s60
    %p62 = scmp.eq.s32.totalorder %s15, 0
    %p63 = por %p61, %p62
    %s65 = sadd.s32 %s64, 1
    %p68 = scmp.eq.s32.totalorder %s9, 1
    %p69 = scmp.ne.s32.totalorder %s64, %s66
    %p70 = scmp.eq.s32.totalorder %s9, 0
    %p71 = por %p69, %p70
    %p72 = scmp.ne.s32.totalorder %s64, %s66
    %p73 = scmp.eq.s32.totalorder %s14, 1
    %p74 = por %p72, %p73
    %p75 = scmp.ne.s32.totalorder %s66, %s67
    %p76 = scmp.eq.s32.totalorder %s14, 0
    %p77 = por %p75, %p76
    %p78 = scmp.ne.s32.totalorder %s66, %s67
    %p79 = scmp.eq.s32.totalorder %s15, 1
    %p80 = por %p78, %p79
    %p82 = scmp.ne.s32.totalorder %s67, %s81
    %p83 = scmp.eq.s32.totalorder %s15, 0
    %p84 = por %p82, %p83
    %s85 = ssub.s32 %s9, %s16
    %p86 = scmp.eq.s32.totalorder %s85, 0
    %s88 = sadd.s32 %s87, 1
    %s89 = scalar_select %p86, %s87, %s88
    %p92 = pneg %p86
    %p93 = scmp.eq.s32.totalorder %s9, 1
    %p94 = por %p92, %p93
    %p95 = scmp.ne.s32.totalorder %s87, %s90
    %p96 = scmp.eq.s32.totalorder %s9, 0
    %p97 = por %p95, %p96
    %p98 = scmp.ne.s32.totalorder %s87, %s90
    %p99 = scmp.eq.s32.totalorder %s14, 1
    %p100 = por %p98, %p99
    %p101 = scmp.ne.s32.totalorder %s90, %s91
    %p102 = scmp.eq.s32.totalorder %s14, 0
    %p103 = por %p101, %p102
    %p104 = scmp.ne.s32.totalorder %s90, %s91
    %p105 = scmp.eq.s32.totalorder %s15, 1
    %p106 = por %p104, %p105
    %p108 = scmp.ne.s32.totalorder %s91, %s107
    %p109 = scmp.eq.s32.totalorder %s15, 0
    %p110 = por %p108, %p109
    %p111 = scmp.le.s32.totalorder 1, %s9
    %p112 = scmp.lt.s32.totalorder %s9, 3
    %p113 = pnand %p111, %p112
    %p114 = pneg %p113
    // Predicated region
    $region9: #{model_forward.1} parent=5 // pred_check
      _
    $region10: #{model_forward.1} parent=5 // pred_check_branch
      %116 = sbr.rel (%p113) target = $region12
    $region11: #{model_forward.1} parent=5 // pred_region
      %s117 = ssub.s32 %s9, 1
      // Predicated region
      $region13: #{model_forward.1} parent=11 // pred_check
        %p118 = pneg %p56
      $region14: #{model_forward.1} parent=11 // pred_check_branch
        %120 = sbr.rel (%p118) target = $region16
      $region15: #{model_forward.1} parent=11 // pred_region
        _
      $region16: #{model_forward.1} parent=11 // pred_fallthru
        _
      // Predicated region
      $region17: #{model_forward.1} parent=11 // pred_check
        %p121 = pneg %p77
      $region18: #{model_forward.1} parent=11 // pred_check_branch
        %123 = sbr.rel (%p121) target = $region20
      $region19: #{model_forward.1} parent=11 // pred_region
        _
      $region20: #{model_forward.1} parent=11 // pred_fallthru
        _
    $region12: #{model_forward.1} parent=5 // pred_fallthru
      _
    %p124 = scmp.lt.s32.totalorder %s9, 2
    // Predicated region
    $region21: #{model_forward.1} parent=5 // pred_check
      %p125 = pneg %p124
    $region22: #{model_forward.1} parent=5 // pred_check_branch
      %127 = sbr.rel (%p125) target = $region24
    $region23: #{model_forward.1} parent=5 // pred_region
      // Predicated region
      $region25: #{model_forward.1} parent=23 // pred_check
        %p128 = pneg %p29
      $region26: #{model_forward.1} parent=23 // pred_check_branch
        %130 = sbr.rel (%p128) target = $region28
      $region27: #{model_forward.1} parent=23 // pred_region
        %p131 = scmp.lt.s32.totalorder %s9, 1
        %s132 = scalar_select %p131, %s9, 1
        %s133 = smul.addr %s132, 3
        %s134 = smul.addr %s133, 4
        %s135 = scalar_lea.vmem %s0, %s134
      $region28: #{model_forward.1} parent=23 // pred_fallthru
        _
    $region24: #{model_forward.1} parent=5 // pred_fallthru
      _
    %p136 = scmp.le.s32.totalorder 1, %s9
    %p137 = scmp.lt.s32.totalorder %s9, 3
    %p138 = pnand %p136, %p137
    %p139 = pneg %p138
    // Predicated region
    $region29: #{model_forward.1} parent=5 // pred_check
      _
    $region30: #{model_forward.1} parent=5 // pred_check_branch
      %141 = sbr.rel (%p138) target = $region32
    $region31: #{model_forward.1} parent=5 // pred_region
      %s142 = ssub.s32 %s9, 1
      %p143 = scmp.lt.s32.totalorder %s14, 1
      %s144 = scalar_select %p143, %s14, 1
      %s145 = smul.addr %s144, 3
      %s146 = smul.addr %s145, 4
      %s147 = scalar_lea.vmem %s0, %s146
      %p148 = pneg %p35
      %p149 = pneg %p32
      %p150 = pneg %p56
      %p151 = pneg %p53
      %p152 = pneg %p77
      %p153 = pneg %p74
      %p154 = pneg %p103
      %p155 = pneg %p100
      %p156 = scmp.lt.s32.totalorder %s14, 1
      %s157 = scalar_select %p156, %s14, 1
      %s158 = smul.addr %s157, 12
      %s159 = smul.addr %s158, 8
      %s160 = scalar_lea.vmem %s3, %s159
      %p161 = scmp.lt.s32.totalorder %s14, 1
      %s162 = scalar_select %p161, %s14, 1
      %s163 = smul.addr %s162, 3
      %s164 = smul.addr %s163, 4
      %s165 = scalar_lea.vmem %s0, %s164
      %p166 = scmp.lt.s32.totalorder %s14, 1
      %s167 = scalar_select %p166, %s14, 1
      %s168 = smul.addr %s167, 12
      %s169 = smul.addr %s168, 8
      %s170 = scalar_lea.vmem %s3, %s169
      %v171 = vld [vmem:[%s1] sm:$0xff]
      %v172 = vld [vmem:[%s1 + $0x8] sm:$0xff]
      %v173 = vld [vmem:[%s1 + $0x10] sm:$0xff]
      %v174 = vld [vmem:[%s1 + $0x18] sm:$0x1]
      %v175 = vld [vmem:[%s165] ss:$4 sm:$0x7]
      %177 = vset.pattern.permute.xlu0 0
      %178 = vperm.xlu0 %177, %v171
      %v179 = vpop.permute.xlu0 %178
      %182 = vset.pattern.permute.xlu0 0
      %183 = vperm.xlu0 %182, %v172
      %v184 = vpop.permute.xlu0 %183
      %187 = vset.pattern.permute.xlu0 0
      %188 = vperm.xlu0 %187, %v173
      %v189 = vpop.permute.xlu0 %188
      %192 = vset.pattern.permute.xlu0 0
      %193 = vperm.xlu0 %192, %v174
      %v194 = vpop.permute.xlu0 %193
      %v197 = vlaneseq
      %v198 = vshrl.u32 %v197, 7
      %v199 = vsub.s32 0, %v198
      %v200 = vrot.slane %v175, %v199
      %v201 = vlaneseq
      %v202 = vshrl.u32 %v201, 7
      %v203 = vsub.s32 1, %v202
      %v204 = vrot.slane %v175, %v203
      %v205 = vlaneseq
      %v206 = vshrl.u32 %v205, 7
      %v207 = vsub.s32 2, %v206
      %v208 = vrot.slane %v175, %v207
      %v212 = vmul.f32 %v179, %v200
      %v213 = vmul.f32 %v179, %v204
      %v214 = vmul.f32 %v179, %v208
      %v215 = vmul.f32 %v184, %v200
      %v216 = vmul.f32 %v184, %v204
      %v217 = vmul.f32 %v184, %v208
      %v218 = vmul.f32 %v189, %v200
      %v219 = vmul.f32 %v189, %v204
      %v220 = vmul.f32 %v189, %v208
      %v221 = vmul.f32 %v194, %v200
      %v222 = vmul.f32 %v194, %v204
      %v223 = vmul.f32 %v194, %v208
      %s224 = scalar_lea.vmem %s165, 1
      %v225 = vld [vmem:[%s224] ss:$4 sm:$0x7]
      %226 = vset.pattern.permute.xlu0 1
      %227 = vperm.xlu0 %226, %v171
      %v228 = vpop.permute.xlu0 %227
      %230 = vset.pattern.permute.xlu0 1
      %231 = vperm.xlu0 %230, %v172
      %v232 = vpop.permute.xlu0 %231
      %234 = vset.pattern.permute.xlu0 1
      %235 = vperm.xlu0 %234, %v173
      %v236 = vpop.permute.xlu0 %235
      %238 = vset.pattern.permute.xlu0 1
      %239 = vperm.xlu0 %238, %v174
      %v240 = vpop.permute.xlu0 %239
      %v243 = vlaneseq
      %v244 = vshrl.u32 %v243, 7
      %v245 = vsub.s32 0, %v244
      %v246 = vrot.slane %v225, %v245
      %v247 = vlaneseq
      %v248 = vshrl.u32 %v247, 7
      %v249 = vsub.s32 1, %v248
      %v250 = vrot.slane %v225, %v249
      %v251 = vlaneseq
      %v252 = vshrl.u32 %v251, 7
      %v253 = vsub.s32 2, %v252
      %v254 = vrot.slane %v225, %v253
      %v258 = vmul.f32 %v228, %v246
      %v259 = vmul.f32 %v228, %v250
      %v260 = vmul.f32 %v228, %v254
      %v261 = vmul.f32 %v232, %v246
      %v262 = vmul.f32 %v232, %v250
      %v263 = vmul.f32 %v232, %v254
      %v264 = vmul.f32 %v236, %v246
      %v265 = vmul.f32 %v236, %v250
      %v266 = vmul.f32 %v236, %v254
      %v267 = vmul.f32 %v240, %v246
      %v268 = vmul.f32 %v240, %v250
      %v269 = vmul.f32 %v240, %v254
      %v270 = vadd.f32 %v212, %v258
      %v271 = vadd.f32 %v213, %v259
      %v272 = vadd.f32 %v214, %v260
      %v273 = vadd.f32 %v215, %v261
      %v274 = vadd.f32 %v216, %v262
      %v275 = vadd.f32 %v217, %v263
      %v276 = vadd.f32 %v218, %v264
      %v277 = vadd.f32 %v219, %v265
      %v278 = vadd.f32 %v220, %v266
      %v279 = vadd.f32 %v221, %v267
      %v280 = vadd.f32 %v222, %v268
      %v281 = vadd.f32 %v223, %v269
      %s282 = scalar_lea.vmem %s165, 2
      %v283 = vld [vmem:[%s282] ss:$4 sm:$0x7]
      %284 = vset.pattern.permute.xlu0 2
      %285 = vperm.xlu0 %284, %v171
      %v286 = vpop.permute.xlu0 %285
      %288 = vset.pattern.permute.xlu0 2
      %289 = vperm.xlu0 %288, %v172
      %v290 = vpop.permute.xlu0 %289
      %292 = vset.pattern.permute.xlu0 2
      %293 = vperm.xlu0 %292, %v173
      %v294 = vpop.permute.xlu0 %293
      %296 = vset.pattern.permute.xlu0 2
      %297 = vperm.xlu0 %296, %v174
      %v298 = vpop.permute.xlu0 %297
      %v301 = vlaneseq
      %v302 = vshrl.u32 %v301, 7
      %v303 = vsub.s32 0, %v302
      %v304 = vrot.slane %v283, %v303
      %v305 = vlaneseq
      %v306 = vshrl.u32 %v305, 7
      %v307 = vsub.s32 1, %v306
      %v308 = vrot.slane %v283, %v307
      %v309 = vlaneseq
      %v310 = vshrl.u32 %v309, 7
      %v311 = vsub.s32 2, %v310
      %v312 = vrot.slane %v283, %v311
      %v316 = vmul.f32 %v286, %v304
      %v317 = vmul.f32 %v286, %v308
      %v318 = vmul.f32 %v286, %v312
      %v319 = vmul.f32 %v290, %v304
      %v320 = vmul.f32 %v290, %v308
      %v321 = vmul.f32 %v290, %v312
      %v322 = vmul.f32 %v294, %v304
      %v323 = vmul.f32 %v294, %v308
      %v324 = vmul.f32 %v294, %v312
      %v325 = vmul.f32 %v298, %v304
      %v326 = vmul.f32 %v298, %v308
      %v327 = vmul.f32 %v298, %v312
      %v328 = vadd.f32 %v270, %v316
      %v329 = vadd.f32 %v271, %v317
      %v330 = vadd.f32 %v272, %v318
      %v331 = vadd.f32 %v273, %v319
      %v332 = vadd.f32 %v274, %v320
      %v333 = vadd.f32 %v275, %v321
      %v334 = vadd.f32 %v276, %v322
      %v335 = vadd.f32 %v277, %v323
      %v336 = vadd.f32 %v278, %v324
      %v337 = vadd.f32 %v279, %v325
      %v338 = vadd.f32 %v280, %v326
      %v339 = vadd.f32 %v281, %v327
      %v340 = vld [vmem:[%s2] sm:$0xff]
      %v341 = vld [vmem:[%s2 + $0x8] sm:$0xff]
      %v342 = vld [vmem:[%s2 + $0x10] sm:$0xff]
      %v343 = vld [vmem:[%s2 + $0x18] sm:$0x1]
      %345 = vset.pattern.permute.xlu0 0
      %346 = vperm.xlu0 %345, %v340
      %v347 = vpop.permute.xlu0 %346
      %350 = vset.pattern.permute.xlu0 0
      %351 = vperm.xlu0 %350, %v341
      %v352 = vpop.permute.xlu0 %351
      %355 = vset.pattern.permute.xlu0 0
      %356 = vperm.xlu0 %355, %v342
      %v357 = vpop.permute.xlu0 %356
      %360 = vset.pattern.permute.xlu0 0
      %361 = vperm.xlu0 %360, %v343
      %v362 = vpop.permute.xlu0 %361
      %v364 = vadd.f32 %v328, %v347
      %v365 = vadd.f32 %v329, %v347
      %v366 = vadd.f32 %v330, %v347
      %v367 = vadd.f32 %v331, %v352
      %v368 = vadd.f32 %v332, %v352
      %v369 = vadd.f32 %v333, %v352
      %v370 = vadd.f32 %v334, %v357
      %v371 = vadd.f32 %v335, %v357
      %v372 = vadd.f32 %v336, %v357
      %v373 = vadd.f32 %v337, %v362
      %v374 = vadd.f32 %v338, %v362
      %v375 = vadd.f32 %v339, %v362
      %376 = vst [vmem:[%s170] sm:$0xff] %v364
      %377 = vst [vmem:[%s170 + $0x8] sm:$0xff] %v365
      %vm378 = vcmask 556032
      %379 = vst.msk [vmem:[%s170 + $0x10] sm:$0xff] %vm378, %v366
      %380 = vst [vmem:[%s170 + $0x18] sm:$0xff] %v367
      %381 = vst [vmem:[%s170 + $0x20] sm:$0xff] %v368
      %382 = vst.msk [vmem:[%s170 + $0x28] sm:$0xff] %vm378, %v369
      %383 = vst [vmem:[%s170 + $0x30] sm:$0xff] %v370
      %384 = vst [vmem:[%s170 + $0x38] sm:$0xff] %v371
      %385 = vst.msk [vmem:[%s170 + $0x40] sm:$0xff] %vm378, %v372
      %386 = vst [vmem:[%s170 + $0x48] sm:$0x1] %v373
      %387 = vst [vmem:[%s170 + $0x50] sm:$0x1] %v374
      %vm388 = vcmask 548864
      %389 = vst.msk [vmem:[%s170 + $0x58] sm:$0x1] %vm388, %v375
      %p390 = scmp.lt.s32.totalorder %s14, 1
      %s391 = scalar_select %p390, %s14, 1
      %s392 = smul.addr %s391, 12
      %s393 = smul.addr %s392, 8
      %s394 = scalar_lea.vmem %s3, %s393
      // Predicated region
      $region33: #{model_forward.1} parent=31 // pred_check
        %p395 = pneg %p100
      $region34: #{model_forward.1} parent=31 // pred_check_branch
        %397 = sbr.rel (%p395) target = $region36
      $region35: #{model_forward.1} parent=31 // pred_region
        _
      $region36: #{model_forward.1} parent=31 // pred_fallthru
        _
    $region32: #{model_forward.1} parent=5 // pred_fallthru
      _
    %p398 = scmp.le.s32.totalorder 2, %s9
    // Predicated region
    $region37: #{model_forward.1} parent=5 // pred_check
      %p399 = pneg %p398
    $region38: #{model_forward.1} parent=5 // pred_check_branch
      %401 = sbr.rel (%p399) target = $region40
    $region39: #{model_forward.1} parent=5 // pred_region
      %s402 = ssub.s32 %s9, 2
      // Predicated region
      $region41: #{model_forward.1} parent=39 // pred_check
        %p403 = pneg %p106
      $region42: #{model_forward.1} parent=39 // pred_check_branch
        %405 = sbr.rel (%p403) target = $region44
      $region43: #{model_forward.1} parent=39 // pred_region
        %p406 = scmp.lt.s32.totalorder %s15, 1
        %s407 = scalar_select %p406, %s15, 1
        %s408 = smul.addr %s407, 12
        %s409 = smul.addr %s408, 8
        %s410 = scalar_lea.vmem %s3, %s409
      $region44: #{model_forward.1} parent=39 // pred_fallthru
        _
    $region40: #{model_forward.1} parent=5 // pred_fallthru
      _
  $region6: #{model_forward.1} parent=0 // loop_footer
    %s13 = sadd.s32 1, %s9
  $region7: #{model_forward.1} parent=0 // loop_footer_branch
    %8 = sbr.rel target = $region3
  $region8: #{model_forward.1} parent=0 // loop_exit
    _

</llo_original>
